<compile_context>
chip_gen: v6e
topology: v6e:2x2x1
jax: 0.10.0
libtpu: 0.0.40
codegen_flags: <defaults>
</compile_context>

<pallas_src>
import numpy as np
import jax
import jax.numpy as jnp
from jax.experimental import pallas as pl
from jax.experimental.pallas import tpu as pltpu

_LANE = 128
_MAX_BLOCK_ROWS = 4096  # (4096, 128) f32 = 2 MiB per pipeline buffer


def _eye_kernel(gid_ref, lam_ref, data_ref, out_ref,
                acc_l1x, acc_l2x, acc_l2c, acc_l2s):
    i = pl.program_id(0)

    @pl.when(i == 0)
    def _init():
        acc_l1x[...] = jnp.zeros_like(acc_l1x)
        acc_l2x[...] = jnp.zeros_like(acc_l2x)
        acc_l2c[...] = jnp.zeros_like(acc_l2c)
        acc_l2s[...] = jnp.zeros_like(acc_l2s)

    # Streamed block: upcast (bf16 params stay narrow in HBM), pure VPU/XLU
    # work fully hidden under the HBM->VMEM DMA.
    blk = data_ref[...].astype(jnp.float32)
    gid = gid_ref[i]

    @pl.when(gid == 0)  # theta_x block: needs L1 and L2
    def _x():
        acc_l1x[...] += jnp.sum(jnp.abs(blk), axis=0, keepdims=True)
        acc_l2x[...] += jnp.sum(blk * blk, axis=0, keepdims=True)

    @pl.when(gid == 1)  # theta_c block: L2 only
    def _c():
        acc_l2c[...] += jnp.sum(blk * blk, axis=0, keepdims=True)

    @pl.when(gid == 2)  # theta_s block: L2 only
    def _s():
        acc_l2s[...] += jnp.sum(blk * blk, axis=0, keepdims=True)

    @pl.when(i == pl.num_programs(0) - 1)
    def _epilogue():
        # One-off cross-lane reduces (XLU) + sqrt (EUP) + weighted combine.
        l1_x = jnp.sum(acc_l1x[...])
        l2_x = jnp.sum(acc_l2x[...])
        l2_c = jnp.sum(acc_l2c[...])
        l2_s = jnp.sum(acc_l2s[...])
        lam_known = lam_ref[0]
        lam_unknown = lam_ref[1]
        lam_shortcut = lam_ref[2]
        out_ref[0, 0] = (lam_known * l2_c
                         + lam_unknown * (l1_x + jnp.sqrt(l2_x))
                         + lam_shortcut * l2_s)


def _slab_dtype(params):
    dts = {jnp.dtype(p.dtype) for p in params}
    if dts and dts == {jnp.dtype(jnp.bfloat16)}:
        return jnp.bfloat16  # keep HBM traffic narrow; upcast in-kernel
    return jnp.float32


def eye_regularization(theta_x, theta_c, theta_s,
                       lambda_eye_known=1.0,
                       lambda_eye_unknown=1.0,
                       lambda_eye_shortcut=1.0):
    groups = [list(theta_x), list(theta_c), list(theta_s)]
    sizes = [int(sum(int(np.prod(p.shape, dtype=np.int64)) for p in g))
             for g in groups]
    total = sum(sizes)
    if total == 0:
        return jnp.float32(0.0)

    dtype = _slab_dtype([p for g in groups for p in g])

    # Tile choice: up to ~2 MiB tiles for large parameter sets, but don't
    # over-pad tiny ones.  Rows stay a multiple of 32 (safe sublane packing
    # for both f32 and bf16).  2 pipeline buffers + tiny accumulators stay
    # well inside default scoped VMEM on v5e/v6e/v7x.
    max_rows = -(-max(sizes) // _LANE)
    block_rows = int(min(_MAX_BLOCK_ROWS, max(32, ((max_rows + 31) // 32) * 32)))
    chunk = block_rows * _LANE

    # Single fused flatten + pad: one extra HBM copy total.
    pieces = []
    gid = []
    for g_idx, (g, n) in enumerate(zip(groups, sizes)):
        if n == 0:
            continue
        pieces.extend(jnp.ravel(p).astype(dtype) for p in g)
        pad = (-n) % chunk
        if pad:
            pieces.append(jnp.zeros((pad,), dtype))
        gid.extend([g_idx] * ((n + pad) // chunk))

    slab = jnp.concatenate(pieces).reshape(-1, _LANE)
    gid = jnp.asarray(np.asarray(gid, dtype=np.int32))
    lam = jnp.asarray([lambda_eye_known, lambda_eye_unknown,
                       lambda_eye_shortcut], dtype=jnp.float32)

    num_blocks = slab.shape[0] // block_rows

    grid_spec = pltpu.PrefetchScalarGridSpec(
        num_scalar_prefetch=1,  # group-id table -> SMEM
        grid=(num_blocks,),
        in_specs=[
            pl.BlockSpec(memory_space=pltpu.SMEM),                         # lambdas
            pl.BlockSpec((block_rows, _LANE), lambda i, gid_ref: (i, 0)),  # slab
        ],
        out_specs=pl.BlockSpec(memory_space=pltpu.SMEM),                   # (1,1) scalar
        scratch_shapes=[pltpu.VMEM((1, _LANE), jnp.float32)] * 4,
    )

    out = pl.pallas_call(
        _eye_kernel,
        out_shape=jax.ShapeDtypeStruct((1, 1), jnp.float32),
        grid_spec=grid_spec,
        compiler_params=pltpu.CompilerParams(
            dimension_semantics=("arbitrary",)),  # reduction axis, carried acc
    )(gid, lam, slab)
    return out[0, 0]


def _reference(theta_x, theta_c, theta_s, lk=1.0, lu=1.0, ls=1.0):
    tx = jnp.concatenate([jnp.ravel(p) for p in theta_x]).astype(jnp.float32)
    tc = jnp.concatenate([jnp.ravel(p) for p in theta_c]).astype(jnp.float32)
    ts = jnp.concatenate([jnp.ravel(p) for p in theta_s]).astype(jnp.float32)
    l1_x = jnp.sum(jnp.abs(tx))
    l2_x = jnp.sum(tx * tx)
    l2_c = jnp.sum(tc * tc)
    l2_s = jnp.sum(ts * ts)
    return lk * l2_c + lu * (l1_x + jnp.sqrt(l2_x)) + ls * l2_s


if __name__ == "__main__":
    key = jax.random.PRNGKey(0)
    k = jax.random.split(key, 6)

    # Synthetic parameter lists (deterministic), shapes consistent with the
    # conv / linear params the module would receive.
    theta_x = [
        jax.random.normal(k[0], (4, 4, 3, 3), dtype=jnp.float32),  # conv weight
        jax.random.normal(k[1], (4,), dtype=jnp.float32),           # conv bias
    ]
    theta_c = [
        jax.random.normal(k[2], (32, 16), dtype=jnp.float32),       # linear weight
        jax.random.normal(k[3], (32,), dtype=jnp.float32),          # linear bias
    ]
    theta_s = [
        jax.random.normal(k[4], (8, 8), dtype=jnp.float32),
        jax.random.normal(k[5], (8,), dtype=jnp.float32),
    ]

    out = eye_regularization(theta_x, theta_c, theta_s,
                             lambda_eye_known=1.0,
                             lambda_eye_unknown=1.0,
                             lambda_eye_shortcut=1.0)
    out = jax.block_until_ready(out)

    ref = _reference(theta_x, theta_c, theta_s)
    assert jnp.allclose(out, ref, rtol=1e-5, atol=1e-5), (out, ref)
    print("KERNEL_OK")
</pallas_src>

<mosaic_0001>
module attributes {stable_mosaic.version = 11 : i64} {
  func.func @_eye_kernel(%arg0: i32, %arg1: memref<3xi32, #tpu.memory_space<smem>>, %arg2: memref<3xf32, #tpu.memory_space<smem>>, %arg3: memref<32x128xf32, #tpu.memory_space<vmem>>, %arg4: memref<1x1xf32, #tpu.memory_space<smem>>, %arg5: memref<1x128xf32, #tpu.memory_space<vmem>>, %arg6: memref<1x128xf32, #tpu.memory_space<vmem>>, %arg7: memref<1x128xf32, #tpu.memory_space<vmem>>, %arg8: memref<1x128xf32, #tpu.memory_space<vmem>>) attributes {dimension_semantics = [#tpu.dimension_semantics<arbitrary>], iteration_bounds = array<i64: 3>, scalar_prefetch = 1 : i64, scratch_operands = 4 : i64, tpu.core_type = #tpu.core_type<tc>, window_params = [{transform_indices = @transform_0, window_bounds = array<i64: 3>}, {transform_indices = @transform_1, window_bounds = array<i64: 32, 128>}, {transform_indices = @transform_2, window_bounds = array<i64: 1, 1>}]} {
    %c0_i32 = arith.constant 0 : i32
    %0 = arith.cmpi eq, %arg0, %c0_i32 : i32
    %1 = arith.extui %0 : i1 to i32
    %c0_i32_0 = arith.constant 0 : i32
    %2 = arith.cmpi ne, %1, %c0_i32_0 : i32
    scf.if %2 {
      %cst = arith.constant 0.000000e+00 : f32
      %18 = vector.broadcast %cst : f32 to vector<1x128xf32>
      %c0_8 = arith.constant 0 : index
      %c0_9 = arith.constant 0 : index
      %19 = vector.load %arg5[%c0_8, %c0_9] : memref<1x128xf32, #tpu.memory_space<vmem>>, vector<1x128xf32>
      tpu.vector_store %arg5[%c0_8, %c0_9], %18 {strides = array<i32>} : memref<1x128xf32, #tpu.memory_space<vmem>>, vector<1x128xf32>,
      %cst_10 = arith.constant 0.000000e+00 : f32
      %20 = vector.broadcast %cst_10 : f32 to vector<1x128xf32>
      %c0_11 = arith.constant 0 : index
      %c0_12 = arith.constant 0 : index
      %21 = vector.load %arg6[%c0_11, %c0_12] : memref<1x128xf32, #tpu.memory_space<vmem>>, vector<1x128xf32>
      tpu.vector_store %arg6[%c0_11, %c0_12], %20 {strides = array<i32>} : memref<1x128xf32, #tpu.memory_space<vmem>>, vector<1x128xf32>,
      %cst_13 = arith.constant 0.000000e+00 : f32
      %22 = vector.broadcast %cst_13 : f32 to vector<1x128xf32>
      %c0_14 = arith.constant 0 : index
      %c0_15 = arith.constant 0 : index
      %23 = vector.load %arg7[%c0_14, %c0_15] : memref<1x128xf32, #tpu.memory_space<vmem>>, vector<1x128xf32>
      tpu.vector_store %arg7[%c0_14, %c0_15], %22 {strides = array<i32>} : memref<1x128xf32, #tpu.memory_space<vmem>>, vector<1x128xf32>,
      %cst_16 = arith.constant 0.000000e+00 : f32
      %24 = vector.broadcast %cst_16 : f32 to vector<1x128xf32>
      %c0_17 = arith.constant 0 : index
      %c0_18 = arith.constant 0 : index
      %25 = vector.load %arg8[%c0_17, %c0_18] : memref<1x128xf32, #tpu.memory_space<vmem>>, vector<1x128xf32>
      tpu.vector_store %arg8[%c0_17, %c0_18], %24 {strides = array<i32>} : memref<1x128xf32, #tpu.memory_space<vmem>>, vector<1x128xf32>,
    } else {
    }
    %c0 = arith.constant 0 : index
    %c0_1 = arith.constant 0 : index
    %3 = vector.load %arg3[%c0, %c0_1] : memref<32x128xf32, #tpu.memory_space<vmem>>, vector<32x128xf32>
    %4 = arith.index_cast %arg0 : i32 to index
    %5 = memref.load %arg1[%4] : memref<3xi32, #tpu.memory_space<smem>>
    %c0_i32_2 = arith.constant 0 : i32
    %6 = arith.cmpi eq, %5, %c0_i32_2 : i32
    %7 = arith.extui %6 : i1 to i32
    %c0_i32_3 = arith.constant 0 : i32
    %8 = arith.cmpi ne, %7, %c0_i32_3 : i32
    scf.if %8 {
      %c0_8 = arith.constant 0 : index
      %c0_9 = arith.constant 0 : index
      %18 = vector.load %arg5[%c0_8, %c0_9] : memref<1x128xf32, #tpu.memory_space<vmem>>, vector<1x128xf32>
      %19 = math.absf %3 : vector<32x128xf32>
      %cst = arith.constant dense<0.000000e+00> : vector<128xf32>
      %20 = vector.multi_reduction <add>, %19, %cst [0] : vector<32x128xf32> to vector<128xf32>
      %21 = vector.shape_cast %20 : vector<128xf32> to vector<1x128xf32>
      %22 = arith.addf %18, %21 : vector<1x128xf32>
      %c0_10 = arith.constant 0 : index
      %c0_11 = arith.constant 0 : index
      %23 = vector.load %arg5[%c0_10, %c0_11] : memref<1x128xf32, #tpu.memory_space<vmem>>, vector<1x128xf32>
      tpu.vector_store %arg5[%c0_10, %c0_11], %22 {strides = array<i32>} : memref<1x128xf32, #tpu.memory_space<vmem>>, vector<1x128xf32>,
      %c0_12 = arith.constant 0 : index
      %c0_13 = arith.constant 0 : index
      %24 = vector.load %arg6[%c0_12, %c0_13] : memref<1x128xf32, #tpu.memory_space<vmem>>, vector<1x128xf32>
      %25 = arith.mulf %3, %3 : vector<32x128xf32>
      %cst_14 = arith.constant dense<0.000000e+00> : vector<128xf32>
      %26 = vector.multi_reduction <add>, %25, %cst_14 [0] : vector<32x128xf32> to vector<128xf32>
      %27 = vector.shape_cast %26 : vector<128xf32> to vector<1x128xf32>
      %28 = arith.addf %24, %27 : vector<1x128xf32>
      %c0_15 = arith.constant 0 : index
      %c0_16 = arith.constant 0 : index
      %29 = vector.load %arg6[%c0_15, %c0_16] : memref<1x128xf32, #tpu.memory_space<vmem>>, vector<1x128xf32>
      tpu.vector_store %arg6[%c0_15, %c0_16], %28 {strides = array<i32>} : memref<1x128xf32, #tpu.memory_space<vmem>>, vector<1x128xf32>,
    } else {
    }
    %c1_i32 = arith.constant 1 : i32
    %9 = arith.cmpi eq, %5, %c1_i32 : i32
    %10 = arith.extui %9 : i1 to i32
    %c0_i32_4 = arith.constant 0 : i32
    %11 = arith.cmpi ne, %10, %c0_i32_4 : i32
    scf.if %11 {
      %c0_8 = arith.constant 0 : index
      %c0_9 = arith.constant 0 : index
      %18 = vector.load %arg7[%c0_8, %c0_9] : memref<1x128xf32, #tpu.memory_space<vmem>>, vector<1x128xf32>
      %19 = arith.mulf %3, %3 : vector<32x128xf32>
      %cst = arith.constant dense<0.000000e+00> : vector<128xf32>
      %20 = vector.multi_reduction <add>, %19, %cst [0] : vector<32x128xf32> to vector<128xf32>
      %21 = vector.shape_cast %20 : vector<128xf32> to vector<1x128xf32>
      %22 = arith.addf %18, %21 : vector<1x128xf32>
      %c0_10 = arith.constant 0 : index
      %c0_11 = arith.constant 0 : index
      %23 = vector.load %arg7[%c0_10, %c0_11] : memref<1x128xf32, #tpu.memory_space<vmem>>, vector<1x128xf32>
      tpu.vector_store %arg7[%c0_10, %c0_11], %22 {strides = array<i32>} : memref<1x128xf32, #tpu.memory_space<vmem>>, vector<1x128xf32>,
    } else {
    }
    %c2_i32 = arith.constant 2 : i32
    %12 = arith.cmpi eq, %5, %c2_i32 : i32
    %13 = arith.extui %12 : i1 to i32
    %c0_i32_5 = arith.constant 0 : i32
    %14 = arith.cmpi ne, %13, %c0_i32_5 : i32
    scf.if %14 {
      %c0_8 = arith.constant 0 : index
      %c0_9 = arith.constant 0 : index
      %18 = vector.load %arg8[%c0_8, %c0_9] : memref<1x128xf32, #tpu.memory_space<vmem>>, vector<1x128xf32>
      %19 = arith.mulf %3, %3 : vector<32x128xf32>
      %cst = arith.constant dense<0.000000e+00> : vector<128xf32>
      %20 = vector.multi_reduction <add>, %19, %cst [0] : vector<32x128xf32> to vector<128xf32>
      %21 = vector.shape_cast %20 : vector<128xf32> to vector<1x128xf32>
      %22 = arith.addf %18, %21 : vector<1x128xf32>
      %c0_10 = arith.constant 0 : index
      %c0_11 = arith.constant 0 : index
      %23 = vector.load %arg8[%c0_10, %c0_11] : memref<1x128xf32, #tpu.memory_space<vmem>>, vector<1x128xf32>
      tpu.vector_store %arg8[%c0_10, %c0_11], %22 {strides = array<i32>} : memref<1x128xf32, #tpu.memory_space<vmem>>, vector<1x128xf32>,
    } else {
    }
    %c2_i32_6 = arith.constant 2 : i32
    %15 = arith.cmpi eq, %arg0, %c2_i32_6 : i32
    %16 = arith.extui %15 : i1 to i32
    %c0_i32_7 = arith.constant 0 : i32
    %17 = arith.cmpi ne, %16, %c0_i32_7 : i32
    scf.if %17 {
      %c0_8 = arith.constant 0 : index
      %c0_9 = arith.constant 0 : index
      %18 = vector.load %arg5[%c0_8, %c0_9] : memref<1x128xf32, #tpu.memory_space<vmem>>, vector<1x128xf32>
      %19 = vector.shape_cast %18 : vector<1x128xf32> to vector<1x1x128xf32>
      %cst = arith.constant dense<0.000000e+00> : vector<1xf32>
      %20 = vector.multi_reduction <add>, %19, %cst [1, 2] : vector<1x1x128xf32> to vector<1xf32>
      %21 = vector.shape_cast %20 : vector<1xf32> to vector<1x1x1xf32>
      %22 = vector.extract %21[0, 0, 0] : f32 from vector<1x1x1xf32>
      %c0_10 = arith.constant 0 : index
      %c0_11 = arith.constant 0 : index
      %23 = vector.load %arg6[%c0_10, %c0_11] : memref<1x128xf32, #tpu.memory_space<vmem>>, vector<1x128xf32>
      %24 = vector.shape_cast %23 : vector<1x128xf32> to vector<1x1x128xf32>
      %cst_12 = arith.constant dense<0.000000e+00> : vector<1xf32>
      %25 = vector.multi_reduction <add>, %24, %cst_12 [1, 2] : vector<1x1x128xf32> to vector<1xf32>
      %26 = vector.shape_cast %25 : vector<1xf32> to vector<1x1x1xf32>
      %27 = vector.extract %26[0, 0, 0] : f32 from vector<1x1x1xf32>
      %c0_13 = arith.constant 0 : index
      %c0_14 = arith.constant 0 : index
      %28 = vector.load %arg7[%c0_13, %c0_14] : memref<1x128xf32, #tpu.memory_space<vmem>>, vector<1x128xf32>
      %29 = vector.shape_cast %28 : vector<1x128xf32> to vector<1x1x128xf32>
      %cst_15 = arith.constant dense<0.000000e+00> : vector<1xf32>
      %30 = vector.multi_reduction <add>, %29, %cst_15 [1, 2] : vector<1x1x128xf32> to vector<1xf32>
      %31 = vector.shape_cast %30 : vector<1xf32> to vector<1x1x1xf32>
      %32 = vector.extract %31[0, 0, 0] : f32 from vector<1x1x1xf32>
      %c0_16 = arith.constant 0 : index
      %c0_17 = arith.constant 0 : index
      %33 = vector.load %arg8[%c0_16, %c0_17] : memref<1x128xf32, #tpu.memory_space<vmem>>, vector<1x128xf32>
      %34 = vector.shape_cast %33 : vector<1x128xf32> to vector<1x1x128xf32>
      %cst_18 = arith.constant dense<0.000000e+00> : vector<1xf32>
      %35 = vector.multi_reduction <add>, %34, %cst_18 [1, 2] : vector<1x1x128xf32> to vector<1xf32>
      %36 = vector.shape_cast %35 : vector<1xf32> to vector<1x1x1xf32>
      %37 = vector.extract %36[0, 0, 0] : f32 from vector<1x1x1xf32>
      %c0_19 = arith.constant 0 : index
      %38 = memref.load %arg2[%c0_19] : memref<3xf32, #tpu.memory_space<smem>>
      %c1 = arith.constant 1 : index
      %39 = memref.load %arg2[%c1] : memref<3xf32, #tpu.memory_space<smem>>
      %c2 = arith.constant 2 : index
      %40 = memref.load %arg2[%c2] : memref<3xf32, #tpu.memory_space<smem>>
      %41 = arith.mulf %38, %32 : f32
      %42 = math.sqrt %27 : f32
      %43 = arith.addf %22, %42 : f32
      %44 = arith.mulf %39, %43 : f32
      %45 = arith.addf %41, %44 : f32
      %46 = arith.mulf %40, %37 : f32
      %47 = arith.addf %45, %46 : f32
      %c0_20 = arith.constant 0 : index
      %c0_21 = arith.constant 0 : index
      %48 = memref.load %arg4[%c0_20, %c0_21] : memref<1x1xf32, #tpu.memory_space<smem>>
      memref.store %47, %arg4[%c0_20, %c0_21] : memref<1x1xf32, #tpu.memory_space<smem>>
    } else {
    }
    return
  }
  func.func @transform_0(%arg0: i32, %arg1: memref<3xi32, #tpu.memory_space<smem>>) -> i32 {
    %c0_i32 = arith.constant 0 : i32
    %c0_i32_0 = arith.constant 0 : i32
    return %c0_i32 : i32
  }
  func.func @transform_1(%arg0: i32, %arg1: memref<3xi32, #tpu.memory_space<smem>>) -> (i32, i32) {
    %c0_i32 = arith.constant 0 : i32
    %c0_i32_0 = arith.constant 0 : i32
    return %arg0, %c0_i32 : i32, i32
  }
  func.func @transform_2(%arg0: i32, %arg1: memref<3xi32, #tpu.memory_space<smem>>) -> (i32, i32) {
    %c0_i32 = arith.constant 0 : i32
    %c0_i32_0 = arith.constant 0 : i32
    %c0_i32_1 = arith.constant 0 : i32
    return %c0_i32, %c0_i32_0 : i32, i32
  }
}

</mosaic_0001>

<llo_original>
// kernel: tpu_custom_call.1
$region0: #{tpu_custom_call.1}
  #allocation0 [shape = 'u32[]', space=smem, size = 0x4, offset = 0x4, fixed_abs, tag = 'smem constant byte address 0x4 - core index']
  #allocation1 [shape = 'u32[144,128]{1,0:T(1,128)}', space=vmem, size = 0x12000, scoped, tag = 'internal scratch']
  #allocation2 [shape = 'f32[1,128]{1,0:T(1,128)}', space=vmem, size = 0x200, scoped, tag = 'scratch operand']
  #allocation3 [shape = 'f32[1,128]{1,0:T(1,128)}', space=vmem, size = 0x200, scoped, tag = 'scratch operand']
  #allocation4 [shape = 'f32[1,128]{1,0:T(1,128)}', space=vmem, size = 0x200, scoped, tag = 'scratch operand']
  #allocation5 [shape = 'f32[1,128]{1,0:T(1,128)}', space=vmem, size = 0x200, scoped, tag = 'scratch operand']
  #allocation6 [shape = 's32[1]{0}', space=sflag, size = 0x4, scoped, tag = 'scoped memory for tpu_custom_call.1']
  #allocation7 [shape = 'u8[512]{0}', space=smem, size = 0x200, scoped, tag = 'prefetched SMEM operand 0']
  %s0 = inlined_call_operand.hbm [shape: s32[3], index: 0, kind: input, shape index: {}]
  %s1 = inlined_call_operand.vmem [shape: f32[3], index: 1, kind: input, shape index: {}]
  %s2 = inlined_call_operand.hbm [shape: f32[96,128], index: 2, kind: input, shape index: {}]
  %s3 = inlined_call_operand.hbm [shape: f32[1,1], index: 3, kind: output, shape index: {}]
  %s4 = sld [smem:[#allocation0]]
  $region69: #{tpu_custom_call.1} parent=0
    _
  %s6 = ssub.s32 1, %s4
  %s7 = scalar_select 0, %s6, %s4
  %9 = dma.hbm_to_smem %s0, 16, [#allocation7], [#allocation6]
  %10 = dma.done [#allocation6], 16
  %11 = sfence
  $region1: #{tpu_custom_call.1} parent=0
    #allocation8 [shape = 'u8[512]{0}', space=smem, size = 0x200, scoped, tag = 'input window, operand 1, single buffered']
    #allocation9 [shape = 's32[2]{0}', space=sflag, size = 0x8, scoped, tag = 'scoped memory for tpu_custom_call.1']
    #allocation10 [shape = 's32[2]{0}', space=sflag, size = 0x8, scoped, tag = 'scoped memory for tpu_custom_call.1']
    #allocation11 [shape = 's32[2]{0}', space=sflag, size = 0x8, scoped, tag = 'scoped memory for tpu_custom_call.1']
    #allocation12 [shape = 'u8[32768]{0}', space=vmem, size = 0x8000, scoped, tag = 'input window, operand 2']
    #allocation13 [shape = 'u8[512]{0}', space=smem, size = 0x200, scoped, tag = 'output window, operand 0, single buffered']
    %12 = vsyncpa [#allocation11], 0
    %13 = vsyncpa [#allocation9], 0
    %s14 = scalar_lea.sflag [#allocation9], 1
    %15 = vsyncpa %s14, 0
    %16 = vsyncpa [#allocation10], 0
    loop: start=0, step=1, limit=5
    $region2: #{tpu_custom_call.1} parent=1 // loop_pre_header
      _
    $region3: #{tpu_custom_call.1} parent=1 // loop_header
      %s18 = sphi 0, %s22
      %p19 = scmp.ge.s32.totalorder %s18, 5
      %s26 = sphi 0, %s26
      %s28 = sphi 0, %s26
      %s29 = sphi 0, %s28
      %s43 = sphi 0, %s29
      %s49 = sphi 0, %s51
      %s52 = sphi 0, %s49
      %s53 = sphi 0, %s52
      %s69 = sphi 0, %s53
      %s73 = sphi 0, %s73
      %s75 = sphi 0, %s73
      %s76 = sphi 0, %s75
      %s90 = sphi 0, %s76
    $region4: #{tpu_custom_call.1} parent=1 // loop_header_branch
      %21 = sbr.rel (%p19) target = $region8
    $region5: #{tpu_custom_call.1} parent=1 // loop_body
      %s23 = ssub.s32 %s18, 1
      %s24 = ssub.s32 %s18, 2
      %s25 = sadd.s32 %s18, 1
      %s27 = sadd.s32 %s26, 1
      %p30 = scmp.eq.s32.totalorder %s18, 2
      %p31 = scmp.ne.s32.totalorder %s26, %s28
      %p32 = scmp.eq.s32.totalorder %s18, 0
      %p33 = por %p31, %p32
      %p34 = scmp.ne.s32.totalorder %s26, %s28
      %p35 = scmp.eq.s32.totalorder %s23, 2
      %p36 = por %p34, %p35
      %p37 = scmp.ne.s32.totalorder %s28, %s29
      %p38 = scmp.eq.s32.totalorder %s23, 0
      %p39 = por %p37, %p38
      %p40 = scmp.ne.s32.totalorder %s28, %s29
      %p41 = scmp.eq.s32.totalorder %s24, 2
      %p42 = por %p40, %p41
      %p44 = scmp.ne.s32.totalorder %s29, %s43
      %p45 = scmp.eq.s32.totalorder %s24, 0
      %p46 = por %p44, %p45
      %s47 = ssub.s32 %s18, %s25
      %p48 = scmp.eq.s32.totalorder %s47, 0
      %s50 = sadd.s32 %s49, 1
      %s51 = scalar_select %p48, %s49, %s50
      %p54 = pneg %p48
      %p55 = scmp.eq.s32.totalorder %s18, 2
      %p56 = por %p54, %p55
      %p57 = scmp.ne.s32.totalorder %s49, %s52
      %p58 = scmp.eq.s32.totalorder %s18, 0
      %p59 = por %p57, %p58
      %p60 = scmp.ne.s32.totalorder %s49, %s52
      %p61 = scmp.eq.s32.totalorder %s23, 2
      %p62 = por %p60, %p61
      %p63 = scmp.ne.s32.totalorder %s52, %s53
      %p64 = scmp.eq.s32.totalorder %s23, 0
      %p65 = por %p63, %p64
      %p66 = scmp.ne.s32.totalorder %s52, %s53
      %p67 = scmp.eq.s32.totalorder %s24, 2
      %p68 = por %p66, %p67
      %p70 = scmp.ne.s32.totalorder %s53, %s69
      %p71 = scmp.eq.s32.totalorder %s24, 0
      %p72 = por %p70, %p71
      %s74 = sadd.s32 %s73, 1
      %p77 = scmp.eq.s32.totalorder %s18, 2
      %p78 = scmp.ne.s32.totalorder %s73, %s75
      %p79 = scmp.eq.s32.totalorder %s18, 0
      %p80 = por %p78, %p79
      %p81 = scmp.ne.s32.totalorder %s73, %s75
      %p82 = scmp.eq.s32.totalorder %s23, 2
      %p83 = por %p81, %p82
      %p84 = scmp.ne.s32.totalorder %s75, %s76
      %p85 = scmp.eq.s32.totalorder %s23, 0
      %p86 = por %p84, %p85
      %p87 = scmp.ne.s32.totalorder %s75, %s76
      %p88 = scmp.eq.s32.totalorder %s24, 2
      %p89 = por %p87, %p88
      %p91 = scmp.ne.s32.totalorder %s76, %s90
      %p92 = scmp.eq.s32.totalorder %s24, 0
      %p93 = por %p91, %p92
      %p94 = scmp.le.s32.totalorder 1, %s18
      %p95 = scmp.lt.s32.totalorder %s18, 4
      %p96 = pnand %p94, %p95
      %p97 = pneg %p96
      // Predicated region
      $region9: #{tpu_custom_call.1} parent=5 // pred_check
        _
      $region10: #{tpu_custom_call.1} parent=5 // pred_check_branch
        %99 = sbr.rel (%p96) target = $region12
      $region11: #{tpu_custom_call.1} parent=5 // pred_region
        %s100 = ssub.s32 %s18, 1
        // Predicated region
        $region13: #{tpu_custom_call.1} parent=11 // pred_check
          %p101 = pneg %p39
        $region14: #{tpu_custom_call.1} parent=11 // pred_check_branch
          %103 = sbr.rel (%p101) target = $region16
        $region15: #{tpu_custom_call.1} parent=11 // pred_region
          %s105 = ssub.s32 16, 16
          %106 = vsyncadd [#allocation11], %s105
          %s108 = sshll.u32 %s1, 4
          %s109 = int_to_ptr.vmem [resolvable:$true] %s108
          %111 = dma.vmem_to_smem %s109, 16, [#allocation8], [#allocation11]
        $region16: #{tpu_custom_call.1} parent=11 // pred_fallthru
          _
      $region12: #{tpu_custom_call.1} parent=5 // pred_fallthru
        _
      %p112 = scmp.lt.s32.totalorder %s18, 3
      // Predicated region
      $region17: #{tpu_custom_call.1} parent=5 // pred_check
        %p113 = pneg %p112
      $region18: #{tpu_custom_call.1} parent=5 // pred_check_branch
        %115 = sbr.rel (%p113) target = $region20
      $region19: #{tpu_custom_call.1} parent=5 // pred_region
        // Predicated region
        $region21: #{tpu_custom_call.1} parent=19 // pred_check
          %p116 = pneg %p59
        $region22: #{tpu_custom_call.1} parent=19 // pred_check_branch
          %118 = sbr.rel (%p116) target = $region24
        $region23: #{tpu_custom_call.1} parent=19 // pred_region
          %s119 = sand.u32 %s49, 1
          %s120 = scalar_lea.sflag [#allocation9], %s119
          %s121 = sand.u32 %s49, 1
          %s122 = smul.addr %s121, 32
          %s123 = scalar_lea.vmem [#allocation12], %s122
          %s124 = smul.u32 4, %s18
          %s126 = ssub.s32 512, 512
          %127 = vsyncadd %s120, %s126
          %s128 = smul.addr %s124, 128
          %s129 = scalar_lea.hbm %s2, %s128
          %s130 = sshll.u32 %s123, 4
          %s131 = int_to_ptr.vmem [resolvable:$true] %s130
          %136 = dma.hbm_to_vmem [thread:$0]  %s129, 512, %s131, %s120, 128, 128, 8
        $region24: #{tpu_custom_call.1} parent=19 // pred_fallthru
          _
      $region20: #{tpu_custom_call.1} parent=5 // pred_fallthru
        _
      %p137 = scmp.le.s32.totalorder 1, %s18
      %p138 = scmp.lt.s32.totalorder %s18, 4
      %p139 = pnand %p137, %p138
      %p140 = pneg %p139
      // Predicated region
      $region25: #{tpu_custom_call.1} parent=5 // pred_check
        _
      $region26: #{tpu_custom_call.1} parent=5 // pred_check_branch
        %142 = sbr.rel (%p139) target = $region28
      $region27: #{tpu_custom_call.1} parent=5 // pred_region
        %s143 = ssub.s32 %s18, 1
        // Predicated region
        $region29: #{tpu_custom_call.1} parent=27 // pred_check
          %p144 = pneg %p39
        $region30: #{tpu_custom_call.1} parent=27 // pred_check_branch
          %146 = sbr.rel (%p144) target = $region32
        $region31: #{tpu_custom_call.1} parent=27 // pred_region
          %147 = dma.done [#allocation11], 16
        $region32: #{tpu_custom_call.1} parent=27 // pred_fallthru
          _
        %s148 = sand.u32 %s52, 1
        %s149 = scalar_lea.sflag [#allocation9], %s148
        %s150 = sand.u32 %s52, 1
        %s151 = smul.addr %s150, 32
        %s152 = scalar_lea.vmem [#allocation12], %s151
        // Predicated region
        $region33: #{tpu_custom_call.1} parent=27 // pred_check
          %p153 = pneg %p65
        $region34: #{tpu_custom_call.1} parent=27 // pred_check_branch
          %155 = sbr.rel (%p153) target = $region36
        $region35: #{tpu_custom_call.1} parent=27 // pred_region
          %156 = dma.done %s149, 512
        $region36: #{tpu_custom_call.1} parent=27 // pred_fallthru
          _
        %157 = sfence
        %p158 = pneg %p39
        %p159 = pneg %p36
        %s160 = sand.u32 %s52, 1
        %s161 = scalar_lea.sflag [#allocation9], %s160
        %s162 = sand.u32 %s52, 1
        %s163 = smul.addr %s162, 32
        %s164 = scalar_lea.vmem [#allocation12], %s163
        %p165 = pneg %p65
        %p166 = pneg %p62
        %p167 = pneg %p86
        %p168 = pneg %p83
        %s169 = smul.u32 4, %s23
        %p170 = scmp.eq.s32.totalorder %s23, 0
        // Predicated region
        $region37: #{tpu_custom_call.1} parent=27 // pred_check
          %p171 = pneg %p170
        $region38: #{tpu_custom_call.1} parent=27 // pred_check_branch
          %173 = sbr.rel (%p171) target = $region40
        $region39: #{tpu_custom_call.1} parent=27 // pred_region
          %174 = vst [vmem:[#allocation2] sm:$0x1] 0.0
          %175 = vst [vmem:[#allocation3] sm:$0x1] 0.0
          %176 = vst [vmem:[#allocation4] sm:$0x1] 0.0
          %177 = vst [vmem:[#allocation5] sm:$0x1] 0.0
        $region40: #{tpu_custom_call.1} parent=27 // pred_fallthru
          _
        %v178 = vld [vmem:[%s152] sm:$0xff]
        %v179 = vld [vmem:[%s152 + $0x8] sm:$0xff]
        %v180 = vld [vmem:[%s152 + $0x10] sm:$0xff]
        %v181 = vld [vmem:[%s152 + $0x18] sm:$0xff]
        %s182 = sld [smem:[#allocation7 + %s23]]
        %p183 = scmp.eq.s32.totalorder %s182, 0
        // Predicated region
        $region41: #{tpu_custom_call.1} parent=27 // pred_check
          %p184 = pneg %p183
        $region42: #{tpu_custom_call.1} parent=27 // pred_check_branch
          %186 = sbr.rel (%p184) target = $region44
        $region43: #{tpu_custom_call.1} parent=27 // pred_region
          %v187 = vld [vmem:[#allocation2] sm:$0x1]
          %v188 = vand.u32 2147483647, %v178
          %v189 = vand.u32 2147483647, %v179
          %v190 = vand.u32 2147483647, %v180
          %v191 = vand.u32 2147483647, %v181
          %v192 = vadd.f32 %v188, %v189
          %v193 = vadd.f32 %v192, %v190
          %v194 = vadd.f32 %v193, %v191
          %v195 = vrot.slane %v194, 4
          %v196 = vadd.f32 %v194, %v195
          %v197 = vrot.slane %v196, 2
          %v198 = vadd.f32 %v196, %v197
          %v199 = vrot.slane %v198, 1
          %v200 = vadd.f32 %v198, %v199
          %v201 = vadd.f32 %v187, %v200
          %202 = vst [vmem:[#allocation2] sm:$0x1] %v201
          %v203 = vld [vmem:[#allocation3] sm:$0x1]
          %v204 = vmul.f32 %v178, %v178
          %v205 = vmul.f32 %v179, %v179
          %v206 = vmul.f32 %v180, %v180
          %v207 = vmul.f32 %v181, %v181
          %v208 = vadd.f32 %v204, %v205
          %v209 = vadd.f32 %v208, %v206
          %v210 = vadd.f32 %v209, %v207
          %v211 = vrot.slane %v210, 4
          %v212 = vadd.f32 %v210, %v211
          %v213 = vrot.slane %v212, 2
          %v214 = vadd.f32 %v212, %v213
          %v215 = vrot.slane %v214, 1
          %v216 = vadd.f32 %v214, %v215
          %v217 = vadd.f32 %v203, %v216
          %218 = vst [vmem:[#allocation3] sm:$0x1] %v217
        $region44: #{tpu_custom_call.1} parent=27 // pred_fallthru
          _
        %p219 = scmp.eq.s32.totalorder %s182, 1
        // Predicated region
        $region45: #{tpu_custom_call.1} parent=27 // pred_check
          %p220 = pneg %p219
        $region46: #{tpu_custom_call.1} parent=27 // pred_check_branch
          %222 = sbr.rel (%p220) target = $region48
        $region47: #{tpu_custom_call.1} parent=27 // pred_region
          %v223 = vld [vmem:[#allocation4] sm:$0x1]
          %v224 = vmul.f32 %v178, %v178
          %v225 = vmul.f32 %v179, %v179
          %v226 = vmul.f32 %v180, %v180
          %v227 = vmul.f32 %v181, %v181
          %v228 = vadd.f32 %v224, %v225
          %v229 = vadd.f32 %v228, %v226
          %v230 = vadd.f32 %v229, %v227
          %v231 = vrot.slane %v230, 4
          %v232 = vadd.f32 %v230, %v231
          %v233 = vrot.slane %v232, 2
          %v234 = vadd.f32 %v232, %v233
          %v235 = vrot.slane %v234, 1
          %v236 = vadd.f32 %v234, %v235
          %v237 = vadd.f32 %v223, %v236
          %238 = vst [vmem:[#allocation4] sm:$0x1] %v237
        $region48: #{tpu_custom_call.1} parent=27 // pred_fallthru
          _
        %p239 = scmp.eq.s32.totalorder %s182, 2
        // Predicated region
        $region49: #{tpu_custom_call.1} parent=27 // pred_check
          %p240 = pneg %p239
        $region50: #{tpu_custom_call.1} parent=27 // pred_check_branch
          %242 = sbr.rel (%p240) target = $region52
        $region51: #{tpu_custom_call.1} parent=27 // pred_region
          %v243 = vld [vmem:[#allocation5] sm:$0x1]
          %v244 = vmul.f32 %v178, %v178
          %v245 = vmul.f32 %v179, %v179
          %v246 = vmul.f32 %v180, %v180
          %v247 = vmul.f32 %v181, %v181
          %v248 = vadd.f32 %v244, %v245
          %v249 = vadd.f32 %v248, %v246
          %v250 = vadd.f32 %v249, %v247
          %v251 = vrot.slane %v250, 4
          %v252 = vadd.f32 %v250, %v251
          %v253 = vrot.slane %v252, 2
          %v254 = vadd.f32 %v252, %v253
          %v255 = vrot.slane %v254, 1
          %v256 = vadd.f32 %v254, %v255
          %v257 = vadd.f32 %v243, %v256
          %258 = vst [vmem:[#allocation5] sm:$0x1] %v257
        $region52: #{tpu_custom_call.1} parent=27 // pred_fallthru
          _
        %p259 = scmp.eq.s32.totalorder %s23, 2
        // Predicated region
        $region53: #{tpu_custom_call.1} parent=27 // pred_check
          %p260 = pneg %p259
        $region54: #{tpu_custom_call.1} parent=27 // pred_check_branch
          %262 = sbr.rel (%p260) target = $region56
        $region55: #{tpu_custom_call.1} parent=27 // pred_region
          %v263 = vld [vmem:[#allocation2] sm:$0x1]
          %vm264 = vcmask 1040384
          %v265 = vsel %vm264, %v263, 0.0
          %266 = vadd.xlane.f32.xlu0 %v265
          %v267 = vpop.xlane.xlu0 %266
          %v268 = vrot.slane %v267, 4
          %v269 = vadd.f32 %v267, %v268
          %v270 = vrot.slane %v269, 2
          %v271 = vadd.f32 %v269, %v270
          %v272 = vrot.slane %v271, 1
          %v273 = vadd.f32 %v271, %v272
          %s274 = vtos %v273
          %v275 = vld [vmem:[#allocation3] sm:$0x1]
          %v276 = vsel %vm264, %v275, 0.0
          %277 = vadd.xlane.f32.xlu0 %v276
          %v278 = vpop.xlane.xlu0 %277
          %v279 = vrot.slane %v278, 4
          %v280 = vadd.f32 %v278, %v279
          %v281 = vrot.slane %v280, 2
          %v282 = vadd.f32 %v280, %v281
          %v283 = vrot.slane %v282, 1
          %v284 = vadd.f32 %v282, %v283
          %s285 = vtos %v284
          %v286 = vld [vmem:[#allocation4] sm:$0x1]
          %v287 = vsel %vm264, %v286, 0.0
          %288 = vadd.xlane.f32.xlu0 %v287
          %v289 = vpop.xlane.xlu0 %288
          %v290 = vrot.slane %v289, 4
          %v291 = vadd.f32 %v289, %v290
          %v292 = vrot.slane %v291, 2
          %v293 = vadd.f32 %v291, %v292
          %v294 = vrot.slane %v293, 1
          %v295 = vadd.f32 %v293, %v294
          %s296 = vtos %v295
          %v297 = vld [vmem:[#allocation5] sm:$0x1]
          %v298 = vsel %vm264, %v297, 0.0
          %299 = vadd.xlane.f32.xlu0 %v298
          %v300 = vpop.xlane.xlu0 %299
          %v301 = vrot.slane %v300, 4
          %v302 = vadd.f32 %v300, %v301
          %v303 = vrot.slane %v302, 2
          %v304 = vadd.f32 %v302, %v303
          %v305 = vrot.slane %v304, 1
          %v306 = vadd.f32 %v304, %v305
          %s307 = vtos %v306
          %s308 = sld [smem:[#allocation8]]
          %s309 = sld [smem:[#allocation8 + $0x1]]
          %s310 = sld [smem:[#allocation8 + $0x2]]
          %s311 = smul.f32 %s308, %s296
          %v312 = vstv %s285
          %v313 = vrsqrt.pop %v312
          %v314 = vmul.f32 %v312, %v313
          %vm315 = vcmp.eq.f32.partialorder %v312, inf
          %v316 = vsel %vm315, %v312, %v314
          %vm317 = vcmp.eq.f32.partialorder %v312, 0.0
          %v318 = vand.u32 %v312, 2147483648
          %v319 = vsel %vm317, %v318, %v316
          %s320 = vtos %v319
          %s321 = sadd.f32 %s274, %s320
          %s322 = smul.f32 %s309, %s321
          %s323 = sadd.f32 %s311, %s322
          %s324 = smul.f32 %s310, %s307
          %s325 = sadd.f32 %s323, %s324
          %s326 = scalar_lea.smem [#allocation13], 0
          %327 = sst [smem:[%s326]] %s325
        $region56: #{tpu_custom_call.1} parent=27 // pred_fallthru
          _
        // Predicated region
        $region57: #{tpu_custom_call.1} parent=27 // pred_check
          %p328 = pneg %p83
        $region58: #{tpu_custom_call.1} parent=27 // pred_check_branch
          %330 = sbr.rel (%p328) target = $region60
        $region59: #{tpu_custom_call.1} parent=27 // pred_region
          %s332 = ssub.s32 16, 16
          %333 = vsyncadd [#allocation10], %s332
          %336 = dma.smem_to_hbm [#allocation13], 16, %s3, [#allocation10]
        $region60: #{tpu_custom_call.1} parent=27 // pred_fallthru
          _
        // Predicated region
        $region61: #{tpu_custom_call.1} parent=27 // pred_check
          %p337 = pneg %p83
        $region62: #{tpu_custom_call.1} parent=27 // pred_check_branch
          %339 = sbr.rel (%p337) target = $region64
        $region63: #{tpu_custom_call.1} parent=27 // pred_region
          %340 = dma.done [#allocation10], 16
        $region64: #{tpu_custom_call.1} parent=27 // pred_fallthru
          _
        %341 = sfence
      $region28: #{tpu_custom_call.1} parent=5 // pred_fallthru
        _
      %p342 = scmp.le.s32.totalorder 2, %s18
      // Predicated region
      $region65: #{tpu_custom_call.1} parent=5 // pred_check
        %p343 = pneg %p342
      $region66: #{tpu_custom_call.1} parent=5 // pred_check_branch
        %345 = sbr.rel (%p343) target = $region68
      $region67: #{tpu_custom_call.1} parent=5 // pred_region
        %s346 = ssub.s32 %s18, 2
      $region68: #{tpu_custom_call.1} parent=5 // pred_fallthru
        _
    $region6: #{tpu_custom_call.1} parent=1 // loop_footer
      %s22 = sadd.s32 1, %s18
    $region7: #{tpu_custom_call.1} parent=1 // loop_footer_branch
      %17 = sbr.rel target = $region3
    $region8: #{tpu_custom_call.1} parent=1 // loop_exit
      _
    %347 = vsyncpa [#allocation9], 1
    %s348 = scalar_lea.sflag [#allocation9], 1
    %349 = vsyncpa %s348, 1
    %350 = vsyncpa [#allocation10], 1
    %s351 = scalar_lea.sflag [#allocation10], 1
    %352 = vsyncpa %s351, 1
    %353 = vsyncpa [#allocation11], 1
    %s354 = scalar_lea.sflag [#allocation11], 1
    %355 = vsyncpa %s354, 1

</llo_original>
